<compile_context>
chip_gen: v7x
topology: tpu7x:2x2x1
jax: 0.10.0
libtpu: 0.0.40
codegen_flags: <defaults>
</compile_context>

<pallas_src>
import functools

import numpy as np
import jax
import jax.numpy as jnp
from jax import lax
from jax.experimental import pallas as pl
from jax.experimental.pallas import tpu as pltpu


LANE = 128            # vreg lane width
MAX_TILE_ROWS = 2048  # 1 MiB f32 per input block; fits all scoped-VMEM defaults
NUM_CORE_SPLITS = 2   # leading "parallel" grid axis (v7x megacore); free elsewhere


# ------------------------------ Pallas kernel -------------------------------

def _kd_mse_kernel(s_ref, t_ref, y_ref, o_ref, *,
                   w_hard, w_soft, tile_rows, rows_valid,
                   steps_per_core, use_8row_acc, needs_mask):
    """Accumulates w_hard*(s-y)^2 + w_soft*(s-t)^2 over row tiles.

    grid = (cores, steps_per_core); axis 0 is "parallel" (megacore), axis 1 is the
    sequential reduction.  Each core owns one output block of partial lane sums and
    accumulates into it directly (the block index does not change along axis 1, so
    the output block stays resident in VMEM across the reduction).
    """
    p = pl.program_id(0)
    i = pl.program_id(1)

    @pl.when(i == 0)
    def _init():
        o_ref[...] = jnp.zeros_like(o_ref)

    s = s_ref[...].astype(jnp.float32)
    dh = s - y_ref[...].astype(jnp.float32)      # hard term: student - targets
    ds = s - t_ref[...].astype(jnp.float32)      # soft term: student - teacher
    contrib = w_hard * (dh * dh) + w_soft * (ds * ds)

    if needs_mask:
        # Unclamped global row index: zeroes (a) the overhang of the last row block
        # and (b) duplicate (clamped) blocks issued to a core that ran out of work.
        step = p * steps_per_core + i
        row_ids = step * tile_rows + lax.broadcasted_iota(jnp.int32, contrib.shape, 0)
        contrib = jnp.where(row_ids < rows_valid, contrib, 0.0)

    if use_8row_acc:
        # Pure per-vreg adds into the resident (8, 128) output block; no per-step
        # cross-sublane reduce in the hot loop.
        o_ref[...] += contrib.reshape(tile_rows // 8, 8, LANE).sum(axis=0)
    else:
        # Tiny single-block inputs (tile_rows == rows < 8 or not a multiple of 8).
        o_ref[...] += jnp.sum(contrib, axis=0, keepdims=True)


# ------------------------------ wrapper --------------------------------------

def distillation_loss(student_outputs, teacher_outputs, targets, T=2.0, alpha=0.3):
    """Scalar distillation loss matching the nn.MSELoss-based DistillationLoss."""
    assert student_outputs.shape == teacher_outputs.shape == targets.shape

    n = int(np.prod(student_outputs.shape))
    # Fold the 1/n means, the (1-alpha)/alpha mix and the 1/T^2 into two constants.
    w_hard = float((1.0 - alpha) / n)
    w_soft = float(alpha / (T * T * n))

    rows = -(-n // LANE)
    padded_n = rows * LANE

    def _as_rows(a):
        a = a.reshape(-1)                       # metadata-only under jit
        if padded_n != n:
            # Identical zero pad in all three tensors -> contributes 0 to both sums.
            # Only taken when numel % 128 != 0; aligned inputs stay copy-free.
            a = jnp.pad(a, (0, padded_n - n))
        return a.reshape(rows, LANE)            # lane-dense view, native dtype

    s2 = _as_rows(student_outputs)
    t2 = _as_rows(teacher_outputs)
    y2 = _as_rows(targets)

    tile_rows = MAX_TILE_ROWS if rows > MAX_TILE_ROWS else rows
    total_steps = -(-rows // tile_rows)
    num_cores = min(NUM_CORE_SPLITS, total_steps)
    steps_per_core = -(-total_steps // num_cores)
    needs_mask = (rows % tile_rows != 0) or (steps_per_core * num_cores != total_steps)
    use_8row_acc = (tile_rows % 8 == 0)
    acc_rows = 8 if use_8row_acc else 1         # acc_rows == 1 implies num_cores == 1

    def _in_index(p, i):
        # Clamp so trailing duplicate steps of a core re-read a valid block; their
        # contribution is zeroed by the in-kernel row mask.
        return (jnp.minimum(p * steps_per_core + i, total_steps - 1), 0)

    kernel = functools.partial(
        _kd_mse_kernel, w_hard=w_hard, w_soft=w_soft, tile_rows=tile_rows,
        rows_valid=rows, steps_per_core=steps_per_core,
        use_8row_acc=use_8row_acc, needs_mask=needs_mask)

    in_bytes = sum(int(np.dtype(a.dtype).itemsize) * padded_n for a in (s2, t2, y2))
    out_rows = num_cores * acc_rows

    partial_lane_sums = pl.pallas_call(
        kernel,
        grid=(num_cores, steps_per_core),
        in_specs=[pl.BlockSpec((tile_rows, LANE), _in_index)] * 3,
        out_specs=pl.BlockSpec((acc_rows, LANE), lambda p, i: (p, 0)),
        out_shape=jax.ShapeDtypeStruct((out_rows, LANE), jnp.float32),
        compiler_params=pltpu.CompilerParams(
            dimension_semantics=("parallel", "arbitrary")),
        cost_estimate=pl.CostEstimate(
            flops=8 * padded_n,
            transcendentals=0,
            bytes_accessed=in_bytes + 4 * out_rows * LANE),
    )(s2, t2, y2)

    # Tiny (<= 16 x 128) cross-core / cross-sublane combine; all heavy traffic and
    # compute happened inside the single kernel above.
    return jnp.sum(partial_lane_sums)


# ------------------------------- demo / check --------------------------------

def _reference_loss(s, t, y, T=2.0, alpha=0.3):
    hard = jnp.mean((s - y) ** 2)
    soft = jnp.mean((s / T - t / T) ** 2)
    return (1.0 - alpha) * hard + alpha * soft


if __name__ == "__main__":
    key = jax.random.PRNGKey(0)
    k1, k2, k3 = jax.random.split(key, 3)

    # Shapes consistent with KD.py: StudentNet/TeacherNet emit (batch, 5, 3).
    B = 2
    student = jax.random.normal(k1, (B, 5, 3), jnp.float32)
    teacher = jax.random.normal(k2, (B, 5, 3), jnp.float32)
    targets = jax.random.normal(k3, (B, 5, 3), jnp.float32)

    loss_fn = jax.jit(functools.partial(distillation_loss, T=2.0, alpha=0.3))
    loss = jax.block_until_ready(loss_fn(student, teacher, targets))
    expect = _reference_loss(student, teacher, targets, T=2.0, alpha=0.3)

    assert loss.shape == (), loss.shape
    assert bool(jnp.isfinite(loss))
    np.testing.assert_allclose(np.asarray(loss), np.asarray(expect),
                               rtol=1e-5, atol=1e-6)

    # Exercise the remaining code paths (aligned copy-free, multi-block + 2-core split
    # with masked ragged tail, native bf16) at still-small shapes.
    def _check(shape, dtype, rtol):
        ks = jax.random.split(jax.random.PRNGKey(1), 3)
        s = jax.random.normal(ks[0], shape, jnp.float32).astype(dtype)
        t = jax.random.normal(ks[1], shape, jnp.float32).astype(dtype)
        y = jax.random.normal(ks[2], shape, jnp.float32).astype(dtype)
        got = jax.block_until_ready(jax.jit(distillation_loss)(s, t, y))
        want = _reference_loss(s.astype(jnp.float32), t.astype(jnp.float32),
                               y.astype(jnp.float32))
        np.testing.assert_allclose(np.asarray(got), np.asarray(want),
                                   rtol=rtol, atol=1e-6)

    _check((8, 16, 8), jnp.float32, 1e-5)     # n=1024: aligned, copy-free, 8-row acc
    _check((64, 72, 64), jnp.float32, 1e-4)   # n=294912: 2 blocks, 2-core split, masked tail
    _check((2, 16, 64), jnp.bfloat16, 2e-3)   # n=2048: bf16 over HBM, f32 math in-kernel

    print("KERNEL_OK")
</pallas_src>

<mosaic_0001>
module attributes {stable_mosaic.version = 11 : i64} {
  func.func @_kd_mse_kernel(%arg0: i32, %arg1: i32, %arg2: memref<1x128xf32, #tpu.memory_space<vmem>>, %arg3: memref<1x128xf32, #tpu.memory_space<vmem>>, %arg4: memref<1x128xf32, #tpu.memory_space<vmem>>, %arg5: memref<1x128xf32, #tpu.memory_space<vmem>>) attributes {dimension_semantics = [#tpu.dimension_semantics<parallel>, #tpu.dimension_semantics<arbitrary>], iteration_bounds = array<i64: 1, 1>, scalar_prefetch = 0 : i64, scratch_operands = 0 : i64, tpu.core_type = #tpu.core_type<tc>, window_params = [{transform_indices = @transform_0, window_bounds = array<i64: 1, 128>}, {transform_indices = @transform_1, window_bounds = array<i64: 1, 128>}, {transform_indices = @transform_2, window_bounds = array<i64: 1, 128>}, {transform_indices = @transform_3, window_bounds = array<i64: 1, 128>}]} {
    %c0_i32 = arith.constant 0 : i32
    %0 = arith.cmpi eq, %arg1, %c0_i32 : i32
    %1 = arith.extui %0 : i1 to i32
    %c0_i32_0 = arith.constant 0 : i32
    %2 = arith.cmpi ne, %1, %c0_i32_0 : i32
    scf.if %2 {
      %cst_12 = arith.constant 0.000000e+00 : f32
      %20 = vector.broadcast %cst_12 : f32 to vector<1x128xf32>
      %c0_13 = arith.constant 0 : index
      %c0_14 = arith.constant 0 : index
      %21 = vector.load %arg5[%c0_13, %c0_14] : memref<1x128xf32, #tpu.memory_space<vmem>>, vector<1x128xf32>
      tpu.vector_store %arg5[%c0_13, %c0_14], %20 {strides = array<i32>} : memref<1x128xf32, #tpu.memory_space<vmem>>, vector<1x128xf32>,
    } else {
    }
    %c0 = arith.constant 0 : index
    %c0_1 = arith.constant 0 : index
    %3 = vector.load %arg2[%c0, %c0_1] : memref<1x128xf32, #tpu.memory_space<vmem>>, vector<1x128xf32>
    %c0_2 = arith.constant 0 : index
    %c0_3 = arith.constant 0 : index
    %4 = vector.load %arg4[%c0_2, %c0_3] : memref<1x128xf32, #tpu.memory_space<vmem>>, vector<1x128xf32>
    %5 = arith.subf %3, %4 : vector<1x128xf32>
    %c0_4 = arith.constant 0 : index
    %c0_5 = arith.constant 0 : index
    %6 = vector.load %arg3[%c0_4, %c0_5] : memref<1x128xf32, #tpu.memory_space<vmem>>, vector<1x128xf32>
    %7 = arith.subf %3, %6 : vector<1x128xf32>
    %8 = arith.mulf %5, %5 : vector<1x128xf32>
    %cst = arith.constant 0.0233333334 : f32
    %9 = vector.broadcast %cst : f32 to vector<1x128xf32>
    %10 = arith.mulf %9, %8 : vector<1x128xf32>
    %11 = arith.mulf %7, %7 : vector<1x128xf32>
    %cst_6 = arith.constant 2.500000e-03 : f32
    %12 = vector.broadcast %cst_6 : f32 to vector<1x128xf32>
    %13 = arith.mulf %12, %11 : vector<1x128xf32>
    %14 = arith.addf %10, %13 : vector<1x128xf32>
    %c0_7 = arith.constant 0 : index
    %c0_8 = arith.constant 0 : index
    %15 = vector.load %arg5[%c0_7, %c0_8] : memref<1x128xf32, #tpu.memory_space<vmem>>, vector<1x128xf32>
    %cst_9 = arith.constant dense<0.000000e+00> : vector<128xf32>
    %16 = vector.multi_reduction <add>, %14, %cst_9 [0] : vector<1x128xf32> to vector<128xf32>
    %17 = vector.shape_cast %16 : vector<128xf32> to vector<1x128xf32>
    %18 = arith.addf %15, %17 : vector<1x128xf32>
    %c0_10 = arith.constant 0 : index
    %c0_11 = arith.constant 0 : index
    %19 = vector.load %arg5[%c0_10, %c0_11] : memref<1x128xf32, #tpu.memory_space<vmem>>, vector<1x128xf32>
    tpu.vector_store %arg5[%c0_10, %c0_11], %18 {strides = array<i32>} : memref<1x128xf32, #tpu.memory_space<vmem>>, vector<1x128xf32>,
    return
  }
  func.func @transform_0(%arg0: i32, %arg1: i32) -> (i32, i32) {
    %c1_i32 = arith.constant 1 : i32
    %0 = arith.muli %arg0, %c1_i32 : i32
    %1 = arith.addi %0, %arg1 : i32
    %c0_i32 = arith.constant 0 : i32
    %2 = arith.minsi %1, %c0_i32 : i32
    %c0_i32_0 = arith.constant 0 : i32
    %c0_i32_1 = arith.constant 0 : i32
    return %2, %c0_i32_0 : i32, i32
  }
  func.func @transform_1(%arg0: i32, %arg1: i32) -> (i32, i32) {
    %c1_i32 = arith.constant 1 : i32
    %0 = arith.muli %arg0, %c1_i32 : i32
    %1 = arith.addi %0, %arg1 : i32
    %c0_i32 = arith.constant 0 : i32
    %2 = arith.minsi %1, %c0_i32 : i32
    %c0_i32_0 = arith.constant 0 : i32
    %c0_i32_1 = arith.constant 0 : i32
    return %2, %c0_i32_0 : i32, i32
  }
  func.func @transform_2(%arg0: i32, %arg1: i32) -> (i32, i32) {
    %c1_i32 = arith.constant 1 : i32
    %0 = arith.muli %arg0, %c1_i32 : i32
    %1 = arith.addi %0, %arg1 : i32
    %c0_i32 = arith.constant 0 : i32
    %2 = arith.minsi %1, %c0_i32 : i32
    %c0_i32_0 = arith.constant 0 : i32
    %c0_i32_1 = arith.constant 0 : i32
    return %2, %c0_i32_0 : i32, i32
  }
  func.func @transform_3(%arg0: i32, %arg1: i32) -> (i32, i32) {
    %c0_i32 = arith.constant 0 : i32
    %c0_i32_0 = arith.constant 0 : i32
    return %arg0, %c0_i32 : i32, i32
  }
}

</mosaic_0001>

<llo_original>
// kernel: distillation_loss.1
$region0: #{distillation_loss.1}
  #allocation0 [shape = 'u32[]', space=smem, size = 0x4, offset = 0x4, fixed_abs, tag = 'smem constant byte address 0x4 - core index']
  #allocation1 [shape = 'u32[144,128]{1,0:T(1,128)}', space=vmem, size = 0x12000, scoped, tag = 'internal scratch']
  %s0 = inlined_call_operand.vmem [shape: f32[1,128], index: 0, kind: input, shape index: {}]
  %s1 = inlined_call_operand.vmem [shape: f32[1,128], index: 1, kind: input, shape index: {}]
  %s2 = inlined_call_operand.vmem [shape: f32[1,128], index: 2, kind: input, shape index: {}]
  %s3 = inlined_call_operand.vmem [shape: f32[1,128], index: 3, kind: output, shape index: {}]
  %s4 = sld [smem:[#allocation0]]
  $region26: #{distillation_loss.1} parent=0
    _
  %s6 = ssub.s32 1, %s4
  %s7 = scalar_select 0, %s6, %s4
  // Predicated region
  $region2: #{distillation_loss.1} parent=0 // pred_check
    _
  $region3: #{distillation_loss.1} parent=0 // pred_check_branch
    %9 = sbr.rel (0) target = $region5
  $region4: #{distillation_loss.1} parent=0 // pred_region
    %s10 = sadd.s32 0, 0
    %p11 = scmp.lt.s32.totalorder %s10, 0
    %s12 = scalar_select %p11, %s10, 0
    %p13 = scmp.lt.s32.totalorder %s12, 0
    %s14 = scalar_select %p13, %s12, 0
    %s15 = scalar_lea.vmem %s0, %s14
    %s16 = sadd.s32 0, 0
    %p17 = scmp.lt.s32.totalorder %s16, 0
    %s18 = scalar_select %p17, %s16, 0
  $region5: #{distillation_loss.1} parent=0 // pred_fallthru
    _
  // Predicated region
  $region6: #{distillation_loss.1} parent=0 // pred_check
    _
  $region7: #{distillation_loss.1} parent=0 // pred_check_branch
    %20 = sbr.rel (0) target = $region9
  $region8: #{distillation_loss.1} parent=0 // pred_region
    %s21 = sadd.s32 0, 0
    %p22 = scmp.lt.s32.totalorder %s21, 0
    %s23 = scalar_select %p22, %s21, 0
    %p24 = scmp.lt.s32.totalorder %s23, 0
    %s25 = scalar_select %p24, %s23, 0
    %s26 = scalar_lea.vmem %s1, %s25
    %s27 = sadd.s32 0, 0
    %p28 = scmp.lt.s32.totalorder %s27, 0
    %s29 = scalar_select %p28, %s27, 0
  $region9: #{distillation_loss.1} parent=0 // pred_fallthru
    _
  // Predicated region
  $region10: #{distillation_loss.1} parent=0 // pred_check
    _
  $region11: #{distillation_loss.1} parent=0 // pred_check_branch
    %31 = sbr.rel (0) target = $region13
  $region12: #{distillation_loss.1} parent=0 // pred_region
    %s32 = sadd.s32 0, 0
    %p33 = scmp.lt.s32.totalorder %s32, 0
    %s34 = scalar_select %p33, %s32, 0
    %p35 = scmp.lt.s32.totalorder %s34, 0
    %s36 = scalar_select %p35, %s34, 0
    %s37 = scalar_lea.vmem %s2, %s36
    %s38 = sadd.s32 0, 0
    %p39 = scmp.lt.s32.totalorder %s38, 0
    %s40 = scalar_select %p39, %s38, 0
  $region13: #{distillation_loss.1} parent=0 // pred_fallthru
    _
  %s41 = sadd.s32 0, 0
  %p42 = scmp.lt.s32.totalorder %s41, 0
  %s43 = scalar_select %p42, %s41, 0
  %p44 = scmp.lt.s32.totalorder %s43, 0
  %s45 = scalar_select %p44, %s43, 0
  %s46 = scalar_lea.vmem %s0, %s45
  %s47 = sadd.s32 0, 0
  %p48 = scmp.lt.s32.totalorder %s47, 0
  %s49 = scalar_select %p48, %s47, 0
  %p50 = scmp.lt.s32.totalorder %s49, 0
  %s51 = scalar_select %p50, %s49, 0
  %s52 = scalar_lea.vmem %s1, %s51
  %s53 = sadd.s32 0, 0
  %p54 = scmp.lt.s32.totalorder %s53, 0
  %s55 = scalar_select %p54, %s53, 0
  %p56 = scmp.lt.s32.totalorder %s55, 0
  %s57 = scalar_select %p56, %s55, 0
  %s58 = scalar_lea.vmem %s2, %s57
  %s59 = sadd.s32 0, 0
  %p60 = scmp.lt.s32.totalorder %s59, 0
  %s61 = scalar_select %p60, %s59, 0
  %p62 = scmp.lt.s32.totalorder %s61, 0
  %s63 = scalar_select %p62, %s61, 0
  %s64 = scalar_lea.vmem %s0, %s63
  %s65 = sadd.s32 0, 0
  %p66 = scmp.lt.s32.totalorder %s65, 0
  %s67 = scalar_select %p66, %s65, 0
  %s68 = sadd.s32 0, 0
  %p69 = scmp.lt.s32.totalorder %s68, 0
  %s70 = scalar_select %p69, %s68, 0
  %p71 = scmp.lt.s32.totalorder %s70, 0
  %s72 = scalar_select %p71, %s70, 0
  %s73 = scalar_lea.vmem %s1, %s72
  %s74 = sadd.s32 0, 0
  %p75 = scmp.lt.s32.totalorder %s74, 0
  %s76 = scalar_select %p75, %s74, 0
  %s77 = sadd.s32 0, 0
  %p78 = scmp.lt.s32.totalorder %s77, 0
  %s79 = scalar_select %p78, %s77, 0
  %p80 = scmp.lt.s32.totalorder %s79, 0
  %s81 = scalar_select %p80, %s79, 0
  %s82 = scalar_lea.vmem %s2, %s81
  %s83 = sadd.s32 0, 0
  %p84 = scmp.lt.s32.totalorder %s83, 0
  %s85 = scalar_select %p84, %s83, 0
  %p86 = scmp.eq.s32.totalorder 0, 0
  // Predicated region
  $region14: #{distillation_loss.1} parent=0 // pred_check
    %p87 = pneg %p86
  $region15: #{distillation_loss.1} parent=0 // pred_check_branch
    %89 = sbr.rel (%p87) target = $region17
  $region16: #{distillation_loss.1} parent=0 // pred_region
    %90 = vst [vmem:[%s3] sm:$0x1] 0.0
  $region17: #{distillation_loss.1} parent=0 // pred_fallthru
    _
  %v91 = vld [vmem:[%s64] sm:$0x1]
  %v92 = vld [vmem:[%s82] sm:$0x1]
  %v93 = vsub.f32 %v91, %v92
  %v94 = vld [vmem:[%s73] sm:$0x1]
  %v95 = vsub.f32 %v91, %v94
  %v96 = vmul.f32 %v93, %v93
  %v97 = vmul.f32 %v96, 0.023333333
  %v98 = vmul.f32 %v95, %v95
  %v99 = vmul.f32 %v98, 0.0025
  %v100 = vadd.f32 %v97, %v99
  %v101 = vld [vmem:[%s3] sm:$0x1]
  %v102 = vadd.f32 %v100, 0.0
  %v103 = vadd.f32 %v101, %v102
  %104 = vst [vmem:[%s3] sm:$0x1] %v103
  // Predicated region
  $region18: #{distillation_loss.1} parent=0 // pred_check
    _
  $region19: #{distillation_loss.1} parent=0 // pred_check_branch
    %106 = sbr.rel (0) target = $region21
  $region20: #{distillation_loss.1} parent=0 // pred_region
    _
  $region21: #{distillation_loss.1} parent=0 // pred_fallthru
    _
  // Predicated region
  $region22: #{distillation_loss.1} parent=0 // pred_check
    _
  $region23: #{distillation_loss.1} parent=0 // pred_check_branch
    %108 = sbr.rel (0) target = $region25
  $region24: #{distillation_loss.1} parent=0 // pred_region
    _
  $region25: #{distillation_loss.1} parent=0 // pred_fallthru
    _

</llo_original>
